<compile_context>
chip_gen: v7x
topology: tpu7x:2x2x1
jax: 0.10.0
libtpu: 0.0.40
codegen_flags: <defaults>
</compile_context>

<pallas_src>
import math

import jax
import jax.numpy as jnp
from jax.experimental import pallas as pl
from jax.experimental.pallas import tpu as pltpu


def _nbytes(x: jax.Array) -> int:
    return math.prod(x.shape) * jnp.dtype(x.dtype).itemsize


# ----------------------------------------------------------------------------
# Opt-in physical identity copy: one whole-array HBM->HBM DMA.
# (RouteLayer.forward itself returns x without copying; this exists only when
#  a fresh buffer is explicitly requested.)
# ----------------------------------------------------------------------------
def _identity_dma_kernel(x_hbm, o_hbm, sem):
    cp = pltpu.make_async_copy(x_hbm, o_hbm, sem.at[0])
    cp.start()
    cp.wait()


def identity_copy(x: jax.Array) -> jax.Array:
    """Physical copy of x via a single HBM->HBM DMA (no VMEM staging)."""
    return pl.pallas_call(
        _identity_dma_kernel,
        out_shape=jax.ShapeDtypeStruct(x.shape, x.dtype),
        in_specs=[pl.BlockSpec(memory_space=pl.ANY)],
        out_specs=pl.BlockSpec(memory_space=pl.ANY),
        scratch_shapes=[pltpu.SemaphoreType.DMA((1,))],
        cost_estimate=pl.CostEstimate(
            flops=0, transcendentals=0, bytes_accessed=2 * _nbytes(x)),
    )(x)


# ----------------------------------------------------------------------------
# Two-route channel concatenation (what the enclosing network does with this
# layer when layer_2 is set): two direct HBM->HBM DMAs into disjoint channel
# ranges of the output. No VMEM, no masked stores, no per-generation VMEM
# limit concerns.
# ----------------------------------------------------------------------------
def _concat_dma_kernel(x1_hbm, x2_hbm, o_hbm, sem):
    c1 = x1_hbm.shape[1]
    cp1 = pltpu.make_async_copy(x1_hbm, o_hbm.at[:, 0:c1], sem.at[0])
    cp2 = pltpu.make_async_copy(x2_hbm, o_hbm.at[:, c1:], sem.at[1])
    cp1.start()
    cp2.start()
    cp1.wait()
    cp2.wait()


def route_concat(x1: jax.Array, x2: jax.Array) -> jax.Array:
    """Concatenate two NCHW feature maps along the channel dimension."""
    N, C1, H, W = x1.shape
    N2, C2, H2, W2 = x2.shape
    assert (N, H, W) == (N2, H2, W2), "routed tensors must share N, H, W"
    assert x1.dtype == x2.dtype

    total_bytes = _nbytes(x1) + _nbytes(x2)
    return pl.pallas_call(
        _concat_dma_kernel,
        out_shape=jax.ShapeDtypeStruct((N, C1 + C2, H, W), x1.dtype),
        in_specs=[
            pl.BlockSpec(memory_space=pl.ANY),
            pl.BlockSpec(memory_space=pl.ANY),
        ],
        out_specs=pl.BlockSpec(memory_space=pl.ANY),
        scratch_shapes=[pltpu.SemaphoreType.DMA((2,))],
        cost_estimate=pl.CostEstimate(
            flops=0, transcendentals=0, bytes_accessed=2 * total_bytes),
    )(x1, x2)


# ----------------------------------------------------------------------------
# RouteLayer
# ----------------------------------------------------------------------------
class RouteLayer:
    """JAX/Pallas equivalent of the PyTorch RouteLayer (no parameters).

    forward(x) is the identity (returns x unchanged, zero cost), matching the
    PyTorch module. `copy=True` requests a physical copy via a single
    HBM->HBM DMA. The optional second argument performs the channel
    concatenation that the enclosing network would otherwise do with this
    layer's routed outputs.
    """

    def __init__(self, layer_1, in_channels_layer_1, height, width,
                 layer_2=None, in_channels_layer_2=None):
        self.layer_1 = layer_1
        self.in_channels_layer_1 = in_channels_layer_1
        self.height = height
        self.width = width
        self.layer_2 = layer_2
        self.in_channels_layer_2 = in_channels_layer_2

    def __repr__(self):
        out_channels, out_height, out_width = self.get_output_chw()
        return ('RouteLayer(layer_1: {}, layer_2: {}, input: ({}x{}x{}), '
                'output: ({}x{}x{}))').format(
                    self.layer_1, self.layer_2, self.in_channels_layer_1,
                    self.height, self.width, out_channels, out_height, out_width)

    def get_output_chw(self):
        if self.layer_2 is None:
            return (self.in_channels_layer_1, self.height, self.width)
        return (self.in_channels_layer_1 + self.in_channels_layer_2,
                self.height, self.width)

    def __call__(self, x, x_2=None, copy=False):
        # TODO(synk): resolving the negative layer indices (layer_1/layer_2)
        # against previously-produced feature maps is network-level
        # bookkeeping, not a tensor op, and is left to the caller.
        if x_2 is not None:
            return route_concat(x, x_2)
        if copy:
            return identity_copy(x)   # opt-in physical copy (single DMA)
        return x                      # == PyTorch forward(x) -> x


if __name__ == "__main__":
    N, C, H, W = 2, 4, 16, 16

    # ---- identity forward (exact semantics of RouteLayer.forward) ----------
    key = jax.random.PRNGKey(0)
    x = jax.random.normal(key, (N, C, H, W), dtype=jnp.float32)

    layer = RouteLayer(layer_1=-4, in_channels_layer_1=C, height=H, width=W)

    # Default path: identity, no kernel, no copy.
    out = layer(x)
    assert out.shape == x.shape and out.dtype == x.dtype
    assert jnp.array_equal(out, x), "identity forward mismatch"
    assert layer.get_output_chw() == (C, H, W)

    # Opt-in physical copy: single HBM->HBM DMA Pallas kernel.
    out_copy = jax.block_until_ready(layer(x, copy=True))
    assert out_copy.shape == x.shape and out_copy.dtype == x.dtype
    assert jnp.array_equal(out_copy, x), "identity DMA copy mismatch"

    # ---- two-route concat (the op the enclosing network performs) ----------
    C2 = 8
    k1, k2 = jax.random.split(jax.random.PRNGKey(0))
    x1 = jax.random.normal(k1, (N, C, H, W), dtype=jnp.float32)
    x2 = jax.random.normal(k2, (N, C2, H, W), dtype=jnp.float32)

    layer2 = RouteLayer(layer_1=-1, in_channels_layer_1=C, height=H, width=W,
                        layer_2=-4, in_channels_layer_2=C2)
    cat = jax.block_until_ready(layer2(x1, x2))
    ref = jnp.concatenate([x1, x2], axis=1)

    assert cat.shape == (N, C + C2, H, W), cat.shape
    assert jnp.array_equal(cat, ref), "route concat mismatch"
    assert layer2.get_output_chw() == (C + C2, H, W)

    print("KERNEL_OK")
</pallas_src>

<mosaic_0001>
module attributes {stable_mosaic.version = 11 : i64} {
  func.func @_identity_dma_kernel(%arg0: memref<2x4x16x16xf32, #tpu.memory_space<any>>, %arg1: memref<2x4x16x16xf32, #tpu.memory_space<any>>, %arg2: memref<1x!tpu.dma_semaphore, #tpu.memory_space<semaphore_mem>>) attributes {dimension_semantics = [], scalar_prefetch = 0 : i64, scratch_operands = 1 : i64, tpu.core_type = #tpu.core_type<tc>} {
    %c0_i32 = arith.constant 0 : i32
    %0 = tpu.memref_slice %arg2[%c0_i32] : memref<1x!tpu.dma_semaphore, #tpu.memory_space<semaphore_mem>> -> memref<1x!tpu.dma_semaphore, #tpu.memory_space<semaphore_mem>>
    %1 = tpu.memref_squeeze %0 : memref<1x!tpu.dma_semaphore, #tpu.memory_space<semaphore_mem>> -> memref<!tpu.dma_semaphore, #tpu.memory_space<semaphore_mem>>
    tpu.enqueue_dma source(%arg0 : memref<2x4x16x16xf32, #tpu.memory_space<any>>) target(%arg1 : memref<2x4x16x16xf32, #tpu.memory_space<any>>) target_semaphore(%1 : memref<!tpu.dma_semaphore, #tpu.memory_space<semaphore_mem>>)
    %c0_i32_0 = arith.constant 0 : i32
    %2 = tpu.memref_slice %arg2[%c0_i32_0] : memref<1x!tpu.dma_semaphore, #tpu.memory_space<semaphore_mem>> -> memref<1x!tpu.dma_semaphore, #tpu.memory_space<semaphore_mem>>
    %3 = tpu.memref_squeeze %2 : memref<1x!tpu.dma_semaphore, #tpu.memory_space<semaphore_mem>> -> memref<!tpu.dma_semaphore, #tpu.memory_space<semaphore_mem>>
    tpu.wait_dma2 semaphore(%3 : memref<!tpu.dma_semaphore, #tpu.memory_space<semaphore_mem>>) src(%arg0 : memref<2x4x16x16xf32, #tpu.memory_space<any>>) dst(%arg1 : memref<2x4x16x16xf32, #tpu.memory_space<any>>)
    return
  }
}

</mosaic_0001>

<llo_original>
// kernel: tpu_custom_call.1
$region0: #{tpu_custom_call.1}
  #allocation0 [shape = 'u32[]', space=smem, size = 0x4, offset = 0x4, fixed_abs, tag = 'smem constant byte address 0x4 - core index']
  #allocation1 [shape = 'u32[144,128]{1,0:T(1,128)}', space=vmem, size = 0x12000, scoped, tag = 'internal scratch']
  #allocation2 [shape = 's32[1]{0}', space=sflag, size = 0x4, scoped, tag = 'scratch operand']
  #allocation3 [shape = 's32[]', space=sflag, size = 0x4, offset = 0, fixed_abs, tag = 'sflag constant byte address 0x0 - dummy sync flag']
  #allocation4 [shape = 'u32[0]{0}', space=smem, size = 0, offset = 0, fixed_abs, tag = 'smem constant byte address 0x0 - null']
  %s0 = inlined_call_operand.hbm [shape: f32[2,4,16,16], index: 0, kind: input, shape index: {}]
  %s1 = inlined_call_operand.hbm [shape: f32[2,4,16,16], index: 1, kind: output, shape index: {}]
  %s2 = sld [smem:[#allocation0]]
  $region2: #{tpu_custom_call.1} parent=0
    _
  %s4 = ssub.s32 1, %s2
  %s5 = scalar_select 0, %s4, %s2
  %s7 = sshll.u32 1, 14
  %s8 = sxor.u32 4294967295, %s7
  %s11 = sshll.u32 3, 24
  %s12 = sxor.u32 4294967295, %s11
  %s13 = sand.u32 0, %s12
  %s15 = sor.u32 %s13, 0
  %18 = dma.general %s0, 2048, %s1, [#allocation2], [#allocation3], [#allocation4], %s15, 0
  %s19 = smul.u32 2, 4
  %s20 = smul.u32 %s19, 16
  %s21 = smul.u32 %s20, 1
  %s22 = sshll.u32 %s21, 4
  %23 = dma.done [#allocation2], %s22
  %24 = vsyncmov [#allocation2]
  %s25 = vpop.sfrf %24
  %p26 = scmp.eq.s32.totalorder %s25, 0
  %p27 = pneg %p26
  %29 = shalt.err (%p27)

</llo_original>
